<compile_context>
chip_gen: v6e
topology: v6e:2x2x1
jax: 0.10.0
libtpu: 0.0.40
codegen_flags: <defaults>
</compile_context>

<pallas_src>
import jax
import jax.numpy as jnp
from jax.experimental import pallas as pl
from jax.experimental.pallas import tpu as pltpu


def _normalization_kernel(params_ref, img_ref, out_ref):
    # params_ref: (br, 2) -> column 0 = mean, column 1 = 1/std (per row of img2d).
    # img_ref / out_ref: (br, bl) lane-dense image tile.
    mean = params_ref[:, 0:1]
    inv_std = params_ref[:, 1:2]
    out_ref[...] = (img_ref[...] - mean) * inv_std


def _sublane_align(itemsize):
    # Packed-dtype minimum tiles: (8,128) f32, (16,128) bf16/fp16, (32,128) int8/fp8.
    if itemsize >= 4:
        return 8
    if itemsize == 2:
        return 16
    return 32


def _vmem_budgets():
    """Return (per-tile byte budget, scoped-VMEM limit) based on chip VMEM size."""
    try:
        info = pltpu.get_tpu_info()
        vmem_cap = int(getattr(info, "vmem_capacity_bytes", 64 << 20))
    except Exception:
        vmem_cap = 64 << 20  # conservative fallback (v7x-sized)
    if vmem_cap >= (128 << 20):          # v5e / v6e: 128 MiB physical VMEM
        return 8 << 20, 64 << 20
    return 8 << 20, 48 << 20             # v7x: 64 MiB VMEM -> cap scoped limit


def _choose_tiles(R, L, itemsize, tile_budget_bytes):
    sub = _sublane_align(itemsize)
    lane = 128
    budget_elems = max(1, tile_budget_bytes // itemsize)

    if L <= budget_elems:
        # Prefer full lane extent: each (br, L) HBM block is fully contiguous.
        bl = L
        max_br = budget_elems // L
        if max_br >= R:
            br = R
        else:
            br = min(R, max(sub, (max_br // sub) * sub))
    else:
        # L alone exceeds the tile budget: minimal row block, wide lane block.
        br = min(R, sub)
        max_bl = budget_elems // max(br, 1)
        bl = min(L, max(lane, (max_bl // lane) * lane))

    # Keep >= ~8 grid steps for v7x's 2-TC sharding + DMA pipelining, but only
    # when the resulting tiles stay >= ~1 MiB (don't shred small problems).
    min_steps = 8
    min_tile_bytes = 1 << 20
    steps = pl.cdiv(R, br) * pl.cdiv(L, bl)
    if steps < min_steps:
        row_steps = pl.cdiv(R, br)
        want_cols = -(-min_steps // row_steps)                    # ceil
        cand_bl = -(-L // want_cols)
        cand_bl = min(L, ((cand_bl + lane - 1) // lane) * lane)   # 128-aligned
        if cand_bl < bl and br * cand_bl * itemsize >= min_tile_bytes:
            bl = cand_bl
    return br, bl


def normalize(img, mean, std):
    """img: (N, C, H, W); mean, std: per-channel, any shape reshapable to (C,)."""
    N, C, H, W = img.shape
    mean = jnp.asarray(mean, jnp.float32).reshape(-1)
    std = jnp.asarray(std, jnp.float32).reshape(-1)
    assert mean.shape == (C,) and std.shape == (C,), "mean/std must be per-channel"

    itemsize = jnp.dtype(img.dtype).itemsize
    R, L = N * C, H * W
    x2d = img.reshape(R, L)

    # Per-row (n, c) scalars merged into one (R, 2) slab: [mean, 1/std].
    mean_r = jnp.tile(mean, N)
    inv_r = jnp.tile(1.0 / std, N)
    params = jnp.stack([mean_r, inv_r], axis=1).astype(img.dtype)  # (R, 2)

    tile_budget, vmem_limit = _vmem_budgets()
    br, bl = _choose_tiles(R, L, itemsize, tile_budget)
    grid = (pl.cdiv(R, br), pl.cdiv(L, bl))

    cost = pl.CostEstimate(
        flops=2 * R * L,                                   # sub + mul per element
        transcendentals=0,
        bytes_accessed=2 * R * L * itemsize + R * 2 * itemsize,
    )

    out2d = pl.pallas_call(
        _normalization_kernel,
        out_shape=jax.ShapeDtypeStruct((R, L), img.dtype),
        grid=grid,
        in_specs=[
            # Param block index is constant in j -> stays resident across the
            # inner grid axis (no re-DMA). Do NOT reorder the grid to (j, i).
            pl.BlockSpec((br, 2), lambda i, j: (i, 0)),
            pl.BlockSpec((br, bl), lambda i, j: (i, j)),
        ],
        out_specs=pl.BlockSpec((br, bl), lambda i, j: (i, j)),
        compiler_params=pltpu.CompilerParams(
            dimension_semantics=("parallel", "parallel"),
            vmem_limit_bytes=vmem_limit,
        ),
        cost_estimate=cost,
    )(params, x2d)

    return out2d.reshape(N, C, H, W)


if __name__ == "__main__":
    # Deterministic parameter setup (synthetic; matches __init__ shapes).
    C = 4
    mean = jnp.array([0.485, 0.456, 0.406, 0.5][:C], dtype=jnp.float32)
    std = jnp.array([0.229, 0.224, 0.225, 0.25][:C], dtype=jnp.float32)

    key = jax.random.PRNGKey(0)
    img = jax.random.uniform(key, (2, C, 16, 16), dtype=jnp.float32)

    out = normalize(img, mean, std)
    out = jax.block_until_ready(out)

    # Reference check (plain JAX broadcast, same semantics as PyTorch).
    ref = (img - mean[None, :, None, None]) / std[None, :, None, None]
    assert jnp.allclose(out, ref, rtol=1e-5, atol=1e-6), "mismatch vs reference"
    print("KERNEL_OK")
</pallas_src>

<mosaic_0001>
module attributes {stable_mosaic.version = 11 : i64} {
  func.func @_normalization_kernel(%arg0: i32, %arg1: i32, %arg2: memref<8x2xf32, #tpu.memory_space<vmem>>, %arg3: memref<8x256xf32, #tpu.memory_space<vmem>>, %arg4: memref<8x256xf32, #tpu.memory_space<vmem>>) attributes {dimension_semantics = [#tpu.dimension_semantics<parallel>, #tpu.dimension_semantics<parallel>], iteration_bounds = array<i64: 1, 1>, scalar_prefetch = 0 : i64, scratch_operands = 0 : i64, tpu.core_type = #tpu.core_type<tc>, window_params = [{transform_indices = @transform_0, window_bounds = array<i64: 8, 2>}, {transform_indices = @transform_1, window_bounds = array<i64: 8, 256>}, {transform_indices = @transform_2, window_bounds = array<i64: 8, 256>}]} {
    %c0 = arith.constant 0 : index
    %c0_0 = arith.constant 0 : index
    %0 = vector.load %arg2[%c0, %c0_0] : memref<8x2xf32, #tpu.memory_space<vmem>>, vector<8x1xf32>
    %c0_1 = arith.constant 0 : index
    %c1 = arith.constant 1 : index
    %1 = vector.load %arg2[%c0_1, %c1] : memref<8x2xf32, #tpu.memory_space<vmem>>, vector<8x1xf32>
    %c0_2 = arith.constant 0 : index
    %c0_3 = arith.constant 0 : index
    %2 = vector.load %arg3[%c0_2, %c0_3] : memref<8x256xf32, #tpu.memory_space<vmem>>, vector<8x256xf32>
    %3 = vector.broadcast %0 : vector<8x1xf32> to vector<8x256xf32>
    %4 = arith.subf %2, %3 : vector<8x256xf32>
    %5 = vector.broadcast %1 : vector<8x1xf32> to vector<8x256xf32>
    %6 = arith.mulf %4, %5 : vector<8x256xf32>
    %c0_4 = arith.constant 0 : index
    %c0_5 = arith.constant 0 : index
    %7 = vector.load %arg4[%c0_4, %c0_5] : memref<8x256xf32, #tpu.memory_space<vmem>>, vector<8x256xf32>
    tpu.vector_store %arg4[%c0_4, %c0_5], %6 {strides = array<i32>} : memref<8x256xf32, #tpu.memory_space<vmem>>, vector<8x256xf32>,
    return
  }
  func.func @transform_0(%arg0: i32, %arg1: i32) -> (i32, i32) {
    %c0_i32 = arith.constant 0 : i32
    %c0_i32_0 = arith.constant 0 : i32
    return %arg0, %c0_i32 : i32, i32
  }
  func.func @transform_1(%arg0: i32, %arg1: i32) -> (i32, i32) {
    %c0_i32 = arith.constant 0 : i32
    return %arg0, %arg1 : i32, i32
  }
  func.func @transform_2(%arg0: i32, %arg1: i32) -> (i32, i32) {
    %c0_i32 = arith.constant 0 : i32
    return %arg0, %arg1 : i32, i32
  }
}

</mosaic_0001>

<llo_original>
// kernel: tpu_custom_call.1
$region0: #{tpu_custom_call.1}
  #allocation0 [shape = 'u32[]', space=smem, size = 0x4, offset = 0x4, fixed_abs, tag = 'smem constant byte address 0x4 - core index']
  #allocation1 [shape = 'u32[144,128]{1,0:T(1,128)}', space=vmem, size = 0x12000, scoped, tag = 'internal scratch']
  %s0 = inlined_call_operand.vmem [shape: f32[8,2], index: 0, kind: input, shape index: {}]
  %s1 = inlined_call_operand.hbm [shape: f32[8,256], index: 1, kind: input, shape index: {}]
  %s2 = inlined_call_operand.hbm [shape: f32[8,256], index: 2, kind: output, shape index: {}]
  %s3 = sld [smem:[#allocation0]]
  $region22: #{tpu_custom_call.1} parent=0
    _
  %s5 = ssub.s32 1, %s3
  %s6 = scalar_select 0, %s5, %s3
  $region1: #{tpu_custom_call.1} parent=0
    #allocation2 [shape = 'u8[8192]{0}', space=vmem, size = 0x2000, scoped, tag = 'input window, operand 1, single buffered']
    #allocation3 [shape = 's32[1]{0}', space=sflag, size = 0x4, scoped, tag = 'scoped memory for tpu_custom_call.1']
    #allocation4 [shape = 's32[1]{0}', space=sflag, size = 0x4, scoped, tag = 'scoped memory for tpu_custom_call.1']
    #allocation5 [shape = 'u8[8192]{0}', space=vmem, size = 0x2000, scoped, tag = 'output window, operand 0, single buffered']
    %7 = vsyncpa [#allocation3], 0
    %8 = vsyncpa [#allocation4], 0
    // Predicated region
    $region2: #{tpu_custom_call.1} parent=1 // pred_check
      _
    $region3: #{tpu_custom_call.1} parent=1 // pred_check_branch
      %10 = sbr.rel (0) target = $region5
    $region4: #{tpu_custom_call.1} parent=1 // pred_region
      _
    $region5: #{tpu_custom_call.1} parent=1 // pred_fallthru
      _
    // Predicated region
    $region6: #{tpu_custom_call.1} parent=1 // pred_check
      _
    $region7: #{tpu_custom_call.1} parent=1 // pred_check_branch
      %12 = sbr.rel (0) target = $region9
    $region8: #{tpu_custom_call.1} parent=1 // pred_region
      %s14 = ssub.s32 256, 256
      %15 = vsyncadd [#allocation3], %s14
      %s17 = sshll.u32 [#allocation2], 4
      %s18 = int_to_ptr.vmem [resolvable:$true] %s17
      %20 = dma.hbm_to_vmem [thread:$0]  %s1, 256, %s18, [#allocation3]
    $region9: #{tpu_custom_call.1} parent=1 // pred_fallthru
      _
    // Predicated region
    $region10: #{tpu_custom_call.1} parent=1 // pred_check
      _
    $region11: #{tpu_custom_call.1} parent=1 // pred_check_branch
      %22 = sbr.rel (0) target = $region13
    $region12: #{tpu_custom_call.1} parent=1 // pred_region
      %23 = dma.done [#allocation3], 256
    $region13: #{tpu_custom_call.1} parent=1 // pred_fallthru
      _
    %v24 = vld [vmem:[%s0] sm:$0xff]
    %v25 = vld [vmem:[#allocation2] sm:$0xff]
    %v26 = vld [vmem:[#allocation2 + $0x8] sm:$0xff]
    %28 = vset.pattern.permute.xlu0 0
    %29 = vperm.xlu0 %28, %v24
    %v30 = vpop.permute.xlu0 %29
    %v32 = vsub.f32 %v25, %v30
    %v33 = vsub.f32 %v26, %v30
    %34 = vset.pattern.permute.xlu0 1
    %35 = vperm.xlu0 %34, %v24
    %v36 = vpop.permute.xlu0 %35
    %v38 = vmul.f32 %v32, %v36
    %v39 = vmul.f32 %v33, %v36
    %40 = vst [vmem:[#allocation5] sm:$0xff] %v38
    %41 = vst [vmem:[#allocation5 + $0x8] sm:$0xff] %v39
    // Predicated region
    $region14: #{tpu_custom_call.1} parent=1 // pred_check
      _
    $region15: #{tpu_custom_call.1} parent=1 // pred_check_branch
      %43 = sbr.rel (0) target = $region17
    $region16: #{tpu_custom_call.1} parent=1 // pred_region
      %s45 = ssub.s32 256, 256
      %46 = vsyncadd [#allocation4], %s45
      %s48 = sshll.u32 [#allocation5], 4
      %s49 = int_to_ptr.vmem [resolvable:$true] %s48
      %51 = dma.vmem_to_hbm [thread:$0]  %s49, 256, %s2, [#allocation4]
    $region17: #{tpu_custom_call.1} parent=1 // pred_fallthru
      _
    // Predicated region
    $region18: #{tpu_custom_call.1} parent=1 // pred_check
      _
    $region19: #{tpu_custom_call.1} parent=1 // pred_check_branch
      %53 = sbr.rel (0) target = $region21
    $region20: #{tpu_custom_call.1} parent=1 // pred_region
      %54 = dma.done [#allocation4], 256
    $region21: #{tpu_custom_call.1} parent=1 // pred_fallthru
      _
    %55 = vsyncpa [#allocation3], 1
    %56 = vsyncpa [#allocation4], 1

</llo_original>
